<compile_context>
chip_gen: v7x
topology: tpu7x:2x2x1
jax: 0.10.0
libtpu: 0.0.40
codegen_flags: <defaults>
</compile_context>

<pallas_src>
import numpy as np
import jax
import jax.numpy as jnp
from jax.experimental import pallas as pl
from jax.experimental.pallas import tpu as pltpu


# ---------------------------------------------------------------------------
# pltpu.roll direction probe (run once, eagerly, cached).  We only rely on
# "out[k] = x[(k - shift) % n]" (jnp.roll convention); if the hardware op
# uses the opposite convention we simply negate the shift.
# ---------------------------------------------------------------------------
_ROLL_SIGN = None


def _pltpu_roll_sign():
    global _ROLL_SIGN
    if _ROLL_SIGN is None:
        def k(x_ref, o_ref):
            o_ref[...] = pltpu.roll(x_ref[...], shift=1, axis=1)

        x = jnp.arange(8 * 128, dtype=jnp.float32).reshape(8, 128)
        out = pl.pallas_call(
            k, out_shape=jax.ShapeDtypeStruct((8, 128), jnp.float32))(x)
        _ROLL_SIGN = 1 if float(out[0, 0]) == float(x[0, 127]) else -1
    return _ROLL_SIGN


# ---------------------------------------------------------------------------
# Kernel 1: ASPP branches + their dconv contribution + folded dconv bias.
# Whole batch at once (BN needs cross-batch statistics).  All pooling /
# broadcasting is done with 0/1 selection matmuls (exact means, MXU work).
# ---------------------------------------------------------------------------
def _aspp_call(xf, wh, ww, wdh, wdw, bdf, eh_t, ew_t, eh, ew):
    N, C, HW = xf.shape
    H = eh.shape[0]
    W = ew.shape[0]
    eps = 1e-5

    def kernel(x_ref, wh_ref, ww_ref, wdh_ref, wdw_ref, bdf_ref,
               eht_ref, ewt_ref, eh_ref, ew_ref, o_ref):
        # adaptive pools as matmuls with 0/1 selection matrices (exact means)
        ph = jnp.concatenate(
            [jnp.dot(x_ref[n].astype(jnp.float32), eht_ref[...],
                     preferred_element_type=jnp.float32) for n in range(N)],
            axis=1) * (1.0 / W)                                  # (C, N*H)
        pw = jnp.concatenate(
            [jnp.dot(x_ref[n].astype(jnp.float32), ewt_ref[...],
                     preferred_element_type=jnp.float32) for n in range(N)],
            axis=1) * (1.0 / H)                                  # (C, N*W)

        def branch(p, w, wd):
            # 1x1 conv (bias=False) -> BatchNorm (batch stats, w=1/b=0) ->
            # ReLU -> dconv 1x1 slice, all on the tiny pooled tensor.
            y = jnp.dot(w, p, preferred_element_type=jnp.float32)
            mu = jnp.mean(y, axis=1, keepdims=True)
            var = jnp.mean((y - mu) ** 2, axis=1, keepdims=True)
            y = jnp.maximum((y - mu) * jax.lax.rsqrt(var + eps), 0.0)
            return jnp.dot(wd, y, preferred_element_type=jnp.float32)

        ch = branch(ph, wh_ref[...], wdh_ref[...])               # (C, N*H)
        cw = branch(pw, ww_ref[...], wdw_ref[...])               # (C, N*W)

        # broadcast back to full (C, HW) per image + folded dconv bias
        for n in range(N):
            o_ref[n] = (jnp.dot(ch[:, n * H:(n + 1) * H], eh_ref[...],
                                preferred_element_type=jnp.float32)
                        + jnp.dot(cw[:, n * W:(n + 1) * W], ew_ref[...],
                                  preferred_element_type=jnp.float32)
                        + bdf_ref[...])

    return pl.pallas_call(
        kernel,
        out_shape=jax.ShapeDtypeStruct((N, C, HW), jnp.float32),
    )(xf, wh, ww, wdh, wdw, bdf, eh_t, ew_t, eh, ew)


# ---------------------------------------------------------------------------
# Kernel 2: the three dilated-conv chains + folded 1x1 convs + gamma residual,
# fused per image.  One block-diagonal matmul per dilation level.
# ---------------------------------------------------------------------------
def _make_fused_kernel(H, W, C, roll_sign):
    HW = H * W

    # tap offsets; order must match the column packing of the block-diag weight
    def offs33(d):
        return [((1 - i) * d, (1 - j) * d) for i in range(3) for j in range(3)]

    def offs31(d):
        return [((1 - i) * d, 0) for i in range(3)]

    def offs13(d):
        return [(0, (1 - j) * d) for j in range(3)]

    def kernel(x_ref, init_ref, wbd_ref, bbd_ref, wfold_ref, g_ref, o_ref, rhs):
        x = x_ref[0].astype(jnp.float32)                   # (C, HW)
        dout = init_ref[0]                                 # dconv bias + ASPP

        lane = jax.lax.broadcasted_iota(jnp.int32, (1, HW), 1)
        row = lane // W
        col = lane % W

        a = b = c = x                                      # chain states
        for li, d in enumerate((1, 2, 4, 8)):
            # boundary masks for this dilation, shared by all three chains
            mrow = {d: row >= d, 0: None, -d: row < (H - d)}
            mcol = {d: col >= d, 0: None, -d: col < (W - d)}
            mcache = {}

            def mask_for(dh, dw):
                key = (dh, dw)
                if key not in mcache:
                    m, n_ = mrow[dh], mcol[dw]
                    if m is None:
                        mcache[key] = n_
                    elif n_ is None:
                        mcache[key] = m
                    else:
                        mcache[key] = m & n_
                return mcache[key]

            def shifted(t, dh, dw):
                """out[h*W+w] = t[(h-dh)*W + (w-dw)], zero where OOB."""
                if dh == 0 and dw == 0:
                    return t
                s = (roll_sign * (dh * W + dw)) % HW
                r = pltpu.roll(t, shift=s, axis=1)
                return jnp.where(mask_for(dh, dw), r, 0.0)

            # build the (15C, HW) im2col RHS directly in VMEM scratch
            t = 0
            for (dh, dw) in offs33(d):
                rhs[t * C:(t + 1) * C, :] = shifted(a, dh, dw)
                t += 1
            for (dh, dw) in offs31(d):
                rhs[t * C:(t + 1) * C, :] = shifted(b, dh, dw)
                t += 1
            for (dh, dw) in offs13(d):
                rhs[t * C:(t + 1) * C, :] = shifted(c, dh, dw)
                t += 1

            # all three chains' convs for this level in one matmul
            y = jnp.dot(wbd_ref[li], rhs[...],
                        preferred_element_type=jnp.float32) + bbd_ref[li]
            y = jnp.maximum(y, 0.0)                        # (3C, HW)

            # folded (conv1/2/3 -> dconv) contribution of this level
            dout = dout + jnp.dot(wfold_ref[...], y,
                                  preferred_element_type=jnp.float32)

            a, b, c = y[0:C], y[C:2 * C], y[2 * C:3 * C]

        g = g_ref[0]
        o_ref[0] = (g * dout + (1.0 - g) * x).astype(o_ref.dtype)

    return kernel


# ---------------------------------------------------------------------------
# MCIF forward (wrapper: NCHW in / NCHW out like the PyTorch module)
# ---------------------------------------------------------------------------
def mcif_forward(x_nchw, params):
    N, C, H, W = x_nchw.shape
    if H != 32 or W != 32:
        # TODO(synk): general adaptive-avg-pool + bilinear resize for H,W != 32.
        raise ValueError("MCIF kernel assumes H == W == 32 (module hard-codes 32).")
    HW = H * W
    xf = x_nchw.reshape(N, C, HW)          # channel-first, H*W on the lane axis

    # ---- host-side algebraic folding / weight packing (glue only) ----------
    def w1x1(name):
        return params[name + '_w'][:, :, 0, 0]

    wd = params['dconv_w'][:, :, 0, 0]                     # (C, 5C)
    wd_b = [wd[:, i * C:(i + 1) * C] for i in range(5)]
    wc = [w1x1('conv1'), w1x1('conv2'), w1x1('conv3')]
    bc = [params['conv1_b'], params['conv2_b'], params['conv3_b']]

    # fold conv1/2/3 into dconv:  wd_i @ (wc_i @ s_i + bc_i)
    wfold = jnp.concatenate([wd_b[i] @ wc[i] for i in range(3)], axis=1)  # (C,3C)
    bdf = (params['dconv_b']
           + wd_b[0] @ bc[0] + wd_b[1] @ bc[1] + wd_b[2] @ bc[2]).reshape(C, 1)

    # block-diagonal per-level weights: rows [3x3 | (3,1) | (1,3)] chains,
    # columns = 9 + 3 + 3 im2col taps (15C total)
    n33 = ['dilate11', 'dilate22', 'dilate33', 'dilate44']
    n31 = ['dilate1', 'dilate2', 'dilate3', 'dilate4']
    n13 = ['dilate5', 'dilate6', 'dilate7', 'dilate8']
    wbd_l, bbd_l = [], []
    for l in range(4):
        w33 = params[n33[l] + '_w']
        w31 = params[n31[l] + '_w']
        w13 = params[n13[l] + '_w']
        blk = jnp.zeros((3 * C, 15 * C), jnp.float32)
        blk = blk.at[0:C, 0:9 * C].set(jnp.concatenate(
            [w33[:, :, i, j] for i in range(3) for j in range(3)], axis=1))
        blk = blk.at[C:2 * C, 9 * C:12 * C].set(jnp.concatenate(
            [w31[:, :, i, 0] for i in range(3)], axis=1))
        blk = blk.at[2 * C:3 * C, 12 * C:15 * C].set(jnp.concatenate(
            [w13[:, :, 0, j] for j in range(3)], axis=1))
        wbd_l.append(blk)
        bbd_l.append(jnp.concatenate(
            [params[n33[l] + '_b'], params[n31[l] + '_b'],
             params[n13[l] + '_b']]).reshape(3 * C, 1))
    wbd = jnp.stack(wbd_l)                                 # (4, 3C, 15C)
    bbd = jnp.stack(bbd_l)                                 # (4, 3C, 1)

    # 0/1 expansion matrices (trace-time numpy constants; used only in ASPP)
    li = np.arange(HW)
    eh_np = (li // W == np.arange(H)[:, None]).astype(np.float32)   # (H, HW)
    ew_np = (li % W == np.arange(W)[:, None]).astype(np.float32)    # (W, HW)

    # ASPP branches + dconv contribution + folded bias -> per-image dout_init
    dout0 = _aspp_call(xf, w1x1('aspph'), w1x1('asppw'),
                       wd_b[3], wd_b[4], bdf,
                       jnp.asarray(eh_np.T), jnp.asarray(ew_np.T),
                       jnp.asarray(eh_np), jnp.asarray(ew_np))

    gamma = jnp.reshape(jnp.asarray(params['gamma'], jnp.float32), (1,))
    kernel = _make_fused_kernel(H, W, C, _pltpu_roll_sign())

    out = pl.pallas_call(
        kernel,
        out_shape=jax.ShapeDtypeStruct((N, C, HW), x_nchw.dtype),
        grid=(N,),
        in_specs=[
            pl.BlockSpec((1, C, HW), lambda n: (n, 0, 0)),          # x
            pl.BlockSpec((1, C, HW), lambda n: (n, 0, 0)),          # dout_init
            pl.BlockSpec((4, 3 * C, 15 * C), lambda n: (0, 0, 0)),  # wbd
            pl.BlockSpec((4, 3 * C, 1), lambda n: (0, 0, 0)),       # bbd
            pl.BlockSpec((C, 3 * C), lambda n: (0, 0)),             # wfold
            pl.BlockSpec(memory_space=pltpu.MemorySpace.SMEM),      # gamma
        ],
        out_specs=pl.BlockSpec((1, C, HW), lambda n: (n, 0, 0)),
        scratch_shapes=[pltpu.VMEM((15 * C, HW), jnp.float32)],     # im2col RHS
        compiler_params=pltpu.CompilerParams(
            dimension_semantics=("parallel",)),
    )(xf, dout0, wbd, bbd, wfold, gamma)

    return out.reshape(N, C, H, W)


# ---------------------------------------------------------------------------
# Pure-JAX reference (for correctness checking)
# ---------------------------------------------------------------------------
def ref_forward(x, params):
    dn = ('NCHW', 'OIHW', 'NCHW')
    prec = jax.lax.Precision.HIGHEST

    def conv(inp, w, b, dil, relu_):
        KH, KW = w.shape[2], w.shape[3]
        pad = ((dil * (KH - 1) // 2,) * 2, (dil * (KW - 1) // 2,) * 2)
        out = jax.lax.conv_general_dilated(inp, w, (1, 1), pad,
                                           rhs_dilation=(dil, dil),
                                           dimension_numbers=dn, precision=prec)
        out = out + b.reshape(1, -1, 1, 1)
        return jnp.maximum(out, 0.0) if relu_ else out

    def aspp(inp, w, pool_axis):
        pooled = jnp.mean(inp, axis=pool_axis, keepdims=True)
        y = jax.lax.conv_general_dilated(pooled, w, (1, 1), 'VALID',
                                         dimension_numbers=dn, precision=prec)
        mu = jnp.mean(y, axis=(0, 2, 3), keepdims=True)
        var = jnp.mean((y - mu) ** 2, axis=(0, 2, 3), keepdims=True)
        yn = jnp.maximum((y - mu) / jnp.sqrt(var + 1e-5), 0.0)
        return jnp.broadcast_to(yn, inp.shape)

    p = params
    d11 = conv(x, p['dilate11_w'], p['dilate11_b'], 1, True)
    d21 = conv(d11, p['dilate22_w'], p['dilate22_b'], 2, True)
    d31 = conv(d21, p['dilate33_w'], p['dilate33_b'], 4, True)
    d41 = conv(d31, p['dilate44_w'], p['dilate44_b'], 8, True)
    b1 = conv(d11 + d21 + d31 + d41, p['conv1_w'], p['conv1_b'], 1, False)

    d12 = conv(x, p['dilate1_w'], p['dilate1_b'], 1, True)
    d22 = conv(d12, p['dilate2_w'], p['dilate2_b'], 2, True)
    d32 = conv(d22, p['dilate3_w'], p['dilate3_b'], 4, True)
    d42 = conv(d32, p['dilate4_w'], p['dilate4_b'], 8, True)
    b2 = conv(d12 + d22 + d32 + d42, p['conv2_w'], p['conv2_b'], 1, False)

    d13 = conv(x, p['dilate5_w'], p['dilate5_b'], 1, True)
    d23 = conv(d13, p['dilate6_w'], p['dilate6_b'], 2, True)
    d33 = conv(d23, p['dilate7_w'], p['dilate7_b'], 4, True)
    d43 = conv(d33, p['dilate8_w'], p['dilate8_b'], 8, True)
    b3 = conv(d13 + d23 + d33 + d43, p['conv3_w'], p['conv3_b'], 1, False)

    bH = aspp(x, p['aspph_w'], 3)   # pool over W
    bW = aspp(x, p['asppw_w'], 2)   # pool over H

    cat = jnp.concatenate([b1, b2, b3, bH, bW], axis=1)
    dout = jax.lax.conv_general_dilated(cat, p['dconv_w'], (1, 1), 'VALID',
                                        dimension_numbers=dn, precision=prec)
    dout = dout + p['dconv_b'].reshape(1, -1, 1, 1)
    g = p['gamma']
    return g * dout + (1.0 - g) * x


# ---------------------------------------------------------------------------
# Deterministic parameter init (shapes follow MCIF.__init__; conv biases zeroed)
# ---------------------------------------------------------------------------
def init_params(key, C):
    keys = list(jax.random.split(key, 32))
    ki = iter(keys)

    def w(cout, cin, kh, kw):
        bound = 1.0 / np.sqrt(cin * kh * kw)
        return jax.random.uniform(next(ki), (cout, cin, kh, kw), jnp.float32,
                                  -bound, bound)

    p = {}
    shapes = [('dilate11', (3, 3)), ('dilate22', (3, 3)), ('dilate33', (3, 3)),
              ('dilate44', (3, 3)),
              ('dilate1', (3, 1)), ('dilate2', (3, 1)), ('dilate3', (3, 1)),
              ('dilate4', (3, 1)),
              ('dilate5', (1, 3)), ('dilate6', (1, 3)), ('dilate7', (1, 3)),
              ('dilate8', (1, 3)),
              ('conv1', (1, 1)), ('conv2', (1, 1)), ('conv3', (1, 1))]
    for name, (kh, kw) in shapes:
        p[name + '_w'] = w(C, C, kh, kw)
        p[name + '_b'] = jnp.zeros((C,), jnp.float32)   # zeroed in module init
    p['dconv_w'] = w(C, 5 * C, 1, 1)
    p['dconv_b'] = jnp.zeros((C,), jnp.float32)
    p['aspph_w'] = w(C, C, 1, 1)                        # bias=False in module
    p['asppw_w'] = w(C, C, 1, 1)
    # Module inits gamma to 0 (output would trivially equal x); use a nonzero
    # deterministic value so the test exercises every branch.
    p['gamma'] = jnp.asarray(0.5, jnp.float32)
    return p


if __name__ == "__main__":
    _pltpu_roll_sign()          # probe hardware roll direction before jit tracing

    key = jax.random.PRNGKey(0)
    kx, kp = jax.random.split(key)
    N, C, H, W = 2, 8, 32, 32   # module hard-codes 32x32 spatial in its ASPP pools
    x = jax.random.normal(kx, (N, C, H, W), jnp.float32)
    params = init_params(kp, C)

    out = jax.jit(mcif_forward)(x, params)
    out = jax.block_until_ready(out)

    ref = ref_forward(x, params)
    np.testing.assert_allclose(np.asarray(out), np.asarray(ref),
                               rtol=1e-3, atol=1e-3)
    print("KERNEL_OK")
</pallas_src>

<mosaic_0001>
module attributes {stable_mosaic.version = 11 : i64} {
  func.func @k(%arg0: memref<8x128xf32, #tpu.memory_space<vmem>>, %arg1: memref<8x128xf32, #tpu.memory_space<vmem>>) attributes {dimension_semantics = [], scalar_prefetch = 0 : i64, scratch_operands = 0 : i64, tpu.core_type = #tpu.core_type<tc>} {
    %c0 = arith.constant 0 : index
    %c0_0 = arith.constant 0 : index
    %0 = vector.load %arg0[%c0, %c0_0] : memref<8x128xf32, #tpu.memory_space<vmem>>, vector<8x128xf32>
    %c1_i32 = arith.constant 1 : i32
    %1 = tpu.dynamic_rotate %0 by %c1_i32 dim 1 : vector<8x128xf32>, i32 -> vector<8x128xf32>
    %c0_1 = arith.constant 0 : index
    %c0_2 = arith.constant 0 : index
    %2 = vector.load %arg1[%c0_1, %c0_2] : memref<8x128xf32, #tpu.memory_space<vmem>>, vector<8x128xf32>
    tpu.vector_store %arg1[%c0_1, %c0_2], %1 {strides = array<i32>} : memref<8x128xf32, #tpu.memory_space<vmem>>, vector<8x128xf32>,
    return
  }
}

</mosaic_0001>

<llo_original>
// kernel: tpu_custom_call.1
$region0: #{tpu_custom_call.1}
  #allocation0 [shape = 'u32[]', space=smem, size = 0x4, offset = 0x4, fixed_abs, tag = 'smem constant byte address 0x4 - core index']
  #allocation1 [shape = 'u32[144,128]{1,0:T(1,128)}', space=vmem, size = 0x12000, scoped, tag = 'internal scratch']
  %s0 = inlined_call_operand.hbm [shape: f32[8,128], index: 0, kind: input, shape index: {}]
  %s1 = inlined_call_operand.hbm [shape: f32[8,128], index: 1, kind: output, shape index: {}]
  %s2 = sld [smem:[#allocation0]]
  $region18: #{tpu_custom_call.1} parent=0
    _
  %s4 = ssub.s32 1, %s2
  %s5 = scalar_select 0, %s4, %s2
  $region1: #{tpu_custom_call.1} parent=0
    #allocation2 [shape = 'u8[4096]{0}', space=vmem, size = 0x1000, scoped, tag = 'input window, operand 0, single buffered']
    #allocation3 [shape = 's32[1]{0}', space=sflag, size = 0x4, scoped, tag = 'scoped memory for tpu_custom_call.1']
    #allocation4 [shape = 's32[1]{0}', space=sflag, size = 0x4, scoped, tag = 'scoped memory for tpu_custom_call.1']
    #allocation5 [shape = 'u8[4096]{0}', space=vmem, size = 0x1000, scoped, tag = 'output window, operand 0, single buffered']
    %6 = vsyncpa [#allocation3], 0
    %7 = vsyncpa [#allocation4], 0
    // Predicated region
    $region2: #{tpu_custom_call.1} parent=1 // pred_check
      _
    $region3: #{tpu_custom_call.1} parent=1 // pred_check_branch
      %9 = sbr.rel (0) target = $region5
    $region4: #{tpu_custom_call.1} parent=1 // pred_region
      %s11 = ssub.s32 128, 128
      %12 = vsyncadd [#allocation3], %s11
      %s14 = sshll.u32 [#allocation2], 4
      %s15 = int_to_ptr.vmem [resolvable:$true] %s14
      %17 = dma.hbm_to_vmem [thread:$0]  %s0, 128, %s15, [#allocation3]
    $region5: #{tpu_custom_call.1} parent=1 // pred_fallthru
      _
    // Predicated region
    $region6: #{tpu_custom_call.1} parent=1 // pred_check
      _
    $region7: #{tpu_custom_call.1} parent=1 // pred_check_branch
      %19 = sbr.rel (0) target = $region9
    $region8: #{tpu_custom_call.1} parent=1 // pred_region
      %20 = dma.done [#allocation3], 128
    $region9: #{tpu_custom_call.1} parent=1 // pred_fallthru
      _
    %v21 = vld [vmem:[#allocation2] sm:$0xff]
    %22 = vrot.lane.b32.xlu0 %v21, 1
    %v23 = vpop.permute.xlu0 %22
    %24 = vst [vmem:[#allocation5] sm:$0xff] %v23
    // Predicated region
    $region10: #{tpu_custom_call.1} parent=1 // pred_check
      _
    $region11: #{tpu_custom_call.1} parent=1 // pred_check_branch
      %26 = sbr.rel (0) target = $region13
    $region12: #{tpu_custom_call.1} parent=1 // pred_region
      %s28 = ssub.s32 128, 128
      %29 = vsyncadd [#allocation4], %s28
      %s31 = sshll.u32 [#allocation5], 4
      %s32 = int_to_ptr.vmem [resolvable:$true] %s31
      %34 = dma.vmem_to_hbm [thread:$0]  %s32, 128, %s1, [#allocation4]
    $region13: #{tpu_custom_call.1} parent=1 // pred_fallthru
      _
    // Predicated region
    $region14: #{tpu_custom_call.1} parent=1 // pred_check
      _
    $region15: #{tpu_custom_call.1} parent=1 // pred_check_branch
      %36 = sbr.rel (0) target = $region17
    $region16: #{tpu_custom_call.1} parent=1 // pred_region
      %37 = dma.done [#allocation4], 128
    $region17: #{tpu_custom_call.1} parent=1 // pred_fallthru
      _
    %38 = vsyncpa [#allocation3], 1
    %39 = vsyncpa [#allocation4], 1

</llo_original>
